<compile_context>
chip_gen: v7x
topology: tpu7x:2x2x1
jax: 0.10.0
libtpu: 0.0.40
codegen_flags: <defaults>
</compile_context>

<pallas_src>
import functools

import jax
import jax.numpy as jnp
from jax.experimental import pallas as pl
from jax.experimental.pallas import tpu as pltpu

NCPAD = 128          # lane-dense padded width for the class dim of the output
NEG_BIG = -1.0e30    # finite "-inf" for masked keys (no inf/NaN arithmetic)


def _round_up(x, m):
    return (x + m - 1) // m * m


def _bf16_exp_supported():
    """bf16 EUP exp is a win on v6e/v7x; keep f32 exp on v5e / unknown chips."""
    try:
        kind = jax.devices()[0].device_kind.lower()
    except Exception:
        return False
    return ("v6" in kind) or ("v7" in kind) or ("7x" in kind)


def _choose_tiles(HW, B):
    """Pick (Tq, Tk, HW_pad) with Tq | Tk and Tk | HW_pad."""
    if HW >= 2048:
        Tq, Tk = 512, 1024                    # large KV tile: fewer steps / rescales
    elif HW >= 256:
        Tq = min(512, _round_up(HW, 256))     # MXU-friendly multiples of 256
        Tk = Tq
    else:
        Tq = Tk = _round_up(HW, 8)            # tiny inputs: a single tile
    HW_pad = _round_up(HW, Tk)
    # v7x has 2 TensorCores: expose >= 2 blocks on the "parallel" grid axes.
    if B * (HW_pad // Tq) < 2 and Tq % 16 == 0:
        Tq //= 2
    return Tq, Tk, HW_pad


def _qk_proj_kernel(x_ref, wq_ref, bq_ref, wk_ref, bk_ref, q_ref, k_ref):
    # x: [Tp, Cin] bf16 ; weights pre-transposed [Cin, A] bf16 ; biases [1, A] f32.
    x = x_ref[...]
    q = jnp.dot(x, wq_ref[...], preferred_element_type=jnp.float32) + bq_ref[...]
    k = jnp.dot(x, wk_ref[...], preferred_element_type=jnp.float32) + bk_ref[...]
    q_ref[...] = q.astype(jnp.bfloat16)
    k_ref[...] = k.astype(jnp.bfloat16)


def _attn_fused_kernel(*refs, add_bg, masked, bf16_exp):
    if masked:
        (q_ref, k_ref, vk_ref, vq_ref, kbias_ref,
         wo_bg_ref, wo_ref, bo_ref, scale_ref, shift_ref,
         o_ref, m_scr, l_scr, acc_scr) = refs
    else:
        (q_ref, k_ref, vk_ref, vq_ref,
         wo_bg_ref, wo_ref, bo_ref, scale_ref, shift_ref,
         o_ref, m_scr, l_scr, acc_scr) = refs
        kbias_ref = None

    ki = pl.program_id(2)
    nk = pl.num_programs(2)

    @pl.when(ki == 0)
    def _():
        m_scr[...] = jnp.full(m_scr.shape, NEG_BIG, jnp.float32)
        l_scr[...] = jnp.zeros(l_scr.shape, jnp.float32)
        acc_scr[...] = jnp.zeros(acc_scr.shape, jnp.float32)

    # s[i, j] = <q_i, k_j>; 1/sqrt(A) already folded into the Q projection.
    s = jax.lax.dot_general(q_ref[...], k_ref[...], (((1,), (1,)), ((), ())),
                            preferred_element_type=jnp.float32)   # [Tq, Tk] f32
    if masked:
        s = s + kbias_ref[...]          # 0 for valid keys, -1e30 for padded keys

    # Online softmax update (state in f32).
    m_prev = m_scr[...]
    m_new = jnp.maximum(m_prev, jnp.max(s, axis=-1, keepdims=True))
    alpha = jnp.exp(m_prev - m_new)                               # [Tq, 1] f32
    if bf16_exp:
        p = jnp.exp((s - m_new).astype(jnp.bfloat16))             # bf16 EUP (v6e/v7x)
    else:
        p = jnp.exp(s - m_new)                                    # f32 EUP (v5e)
    l_scr[...] = alpha * l_scr[...] + jnp.sum(p, axis=-1, keepdims=True,
                                              dtype=jnp.float32)
    acc_scr[...] = alpha * acc_scr[...] + jnp.dot(
        p.astype(jnp.bfloat16), vk_ref[...],
        preferred_element_type=jnp.float32)
    m_scr[...] = m_new

    @pl.when(ki == nk - 1)
    def _():
        # Finalize: normalize, residual add, fused bg-concat + out conv + BN.
        att = acc_scr[...] / l_scr[...] + vq_ref[...]             # [Tq, Cl] f32
        y = jnp.dot(att, wo_ref[...], preferred_element_type=jnp.float32)
        if add_bg:
            bg = 2.0 - jnp.max(att, axis=-1, keepdims=True)       # [Tq, 1]
            y = y + bg * wo_bg_ref[...]
        y = y + bo_ref[...]
        o_ref[...] = (y * scale_ref[...] + shift_ref[...]).astype(o_ref.dtype)


def self_attention_cam_forward(logits, hypercolumn, params, *, num_class,
                               attention_dim):
    """Forward pass. logits: [B, Cl, H, W], hypercolumn: [B, Cin, H, W] (NCHW)."""
    B, Cl, H, W = logits.shape
    Cin = hypercolumn.shape[1]
    HW = H * W
    NC = num_class
    A = attention_dim
    add_bg = (Cl != num_class)

    Tq, Tk, HW_pad = _choose_tiles(HW, B)
    nq = HW_pad // Tq
    nk = HW_pad // Tk
    Tp = min(Tk, 512)                    # projection-prologue row tile
    masked = (HW_pad != HW)
    bf16_exp = _bf16_exp_supported()

    # NCHW -> [B, HW, C] (row-major spatial flatten, same as torch reshape).
    x = jnp.transpose(hypercolumn, (0, 2, 3, 1)).reshape(B, HW, Cin)
    v = jnp.transpose(logits, (0, 2, 3, 1)).reshape(B, HW, Cl)
    if masked:
        pad = HW_pad - HW
        x = jnp.pad(x, ((0, 0), (0, pad), (0, 0)))
        v = jnp.pad(v, ((0, 0), (0, pad), (0, 0)))
    x = x.astype(jnp.bfloat16)           # MXU operand
    vk = v.astype(jnp.bfloat16)          # KV-side V: bf16 (halves inner-loop DMA)
    vq = v.astype(jnp.float32)           # residual add stays exact in f32

    # Pre-transpose 1x1-conv weights; fold 1/sqrt(attention_dim) into Q path.
    inv_sqrt_a = 1.0 / (A ** 0.5)
    wq_t = (params["wq"].T * inv_sqrt_a).astype(jnp.bfloat16)     # [Cin, A]
    bq = (params["bq"] * inv_sqrt_a).astype(jnp.float32)          # [1, A]
    wk_t = params["wk"].T.astype(jnp.bfloat16)                    # [Cin, A]
    bk = params["bk"].astype(jnp.float32)                         # [1, A]

    # --- Prologue: Q/K projections computed ONCE (not once per KV tile). ---
    q_pre, k_pre = pl.pallas_call(
        _qk_proj_kernel,
        out_shape=(jax.ShapeDtypeStruct((B, HW_pad, A), jnp.bfloat16),
                   jax.ShapeDtypeStruct((B, HW_pad, A), jnp.bfloat16)),
        grid=(B, HW_pad // Tp),
        in_specs=[
            pl.BlockSpec((None, Tp, Cin), lambda b, i: (b, i, 0)),
            pl.BlockSpec((Cin, A), lambda b, i: (0, 0)),
            pl.BlockSpec((1, A), lambda b, i: (0, 0)),
            pl.BlockSpec((Cin, A), lambda b, i: (0, 0)),
            pl.BlockSpec((1, A), lambda b, i: (0, 0)),
        ],
        out_specs=(pl.BlockSpec((None, Tp, A), lambda b, i: (b, i, 0)),
                   pl.BlockSpec((None, Tp, A), lambda b, i: (b, i, 0))),
        compiler_params=pltpu.CompilerParams(
            dimension_semantics=("parallel", "parallel"),
            vmem_limit_bytes=32 * 1024 * 1024),
    )(x, wq_t, bq, wk_t, bk)

    # out_layer folded: y = bg * Wo[:,0]^T + att @ Wo[:,1:]^T + bo, padded to
    # NCPAD output lanes for an unmasked, lane-dense store.
    wo = params["wo"]                                             # [NC, NC]
    if add_bg:
        wo_bg, wo_rest = wo[:, 0], wo[:, 1:]                      # [NC], [NC, Cl]
    else:
        wo_bg, wo_rest = jnp.zeros((NC,), jnp.float32), wo        # Cl == NC
    wo_rest_t = jnp.zeros((Cl, NCPAD), jnp.float32).at[:, :NC].set(wo_rest.T)
    wo_bg_p = jnp.zeros((1, NCPAD), jnp.float32).at[0, :NC].set(wo_bg)
    bo_p = jnp.zeros((1, NCPAD), jnp.float32).at[0, :NC].set(params["bo"][0])

    # Fold eval-mode BatchNorm into per-channel scale/shift (padded).
    eps = 1e-5
    scale = params["bn_gamma"][0] / jnp.sqrt(params["bn_var"][0] + eps)
    shift = params["bn_beta"][0] - params["bn_mean"][0] * scale
    scale_p = jnp.zeros((1, NCPAD), jnp.float32).at[0, :NC].set(scale)
    shift_p = jnp.zeros((1, NCPAD), jnp.float32).at[0, :NC].set(shift)

    in_specs = [
        pl.BlockSpec((None, Tq, A), lambda b, qi, ki: (b, qi, 0)),    # Q (rows)
        pl.BlockSpec((None, Tk, A), lambda b, qi, ki: (b, ki, 0)),    # K (rows)
        pl.BlockSpec((None, Tk, Cl), lambda b, qi, ki: (b, ki, 0)),   # V (keys, bf16)
        pl.BlockSpec((None, Tq, Cl), lambda b, qi, ki: (b, qi, 0)),   # V (residual, f32)
    ]
    operands = [q_pre, k_pre, vk, vq]
    if masked:
        kbias = jnp.full((1, HW_pad), NEG_BIG, jnp.float32).at[0, :HW].set(0.0)
        in_specs.append(pl.BlockSpec((1, Tk), lambda b, qi, ki: (0, ki)))
        operands.append(kbias)
    in_specs += [
        pl.BlockSpec((1, NCPAD), lambda b, qi, ki: (0, 0)),    # wo bg column
        pl.BlockSpec((Cl, NCPAD), lambda b, qi, ki: (0, 0)),   # wo rest^T (padded)
        pl.BlockSpec((1, NCPAD), lambda b, qi, ki: (0, 0)),    # bo
        pl.BlockSpec((1, NCPAD), lambda b, qi, ki: (0, 0)),    # bn scale
        pl.BlockSpec((1, NCPAD), lambda b, qi, ki: (0, 0)),    # bn shift
    ]
    operands += [wo_bg_p, wo_rest_t, bo_p, scale_p, shift_p]

    kernel = functools.partial(_attn_fused_kernel, add_bg=add_bg,
                               masked=masked, bf16_exp=bf16_exp)

    out = pl.pallas_call(
        kernel,
        out_shape=jax.ShapeDtypeStruct((B, HW_pad, NCPAD), jnp.float32),
        grid=(B, nq, nk),
        in_specs=in_specs,
        out_specs=pl.BlockSpec((None, Tq, NCPAD), lambda b, qi, ki: (b, qi, 0)),
        scratch_shapes=[
            pltpu.VMEM((Tq, 1), jnp.float32),    # m  (running max)
            pltpu.VMEM((Tq, 1), jnp.float32),    # l  (running denom)
            pltpu.VMEM((Tq, Cl), jnp.float32),   # acc (P@V accumulator)
        ],
        compiler_params=pltpu.CompilerParams(
            dimension_semantics=("parallel", "parallel", "arbitrary"),
            vmem_limit_bytes=32 * 1024 * 1024),
    )(*operands)

    # Slice off HW / class padding, back to NCHW.
    out = out[:, :HW, :NC]
    return jnp.transpose(out.reshape(B, H, W, NC), (0, 3, 1, 2))


def init_params(key, num_class, in_dim, attention_dim):
    """Deterministic parameter init matching the PyTorch module's shapes."""
    ks = jax.random.split(key, 6)

    def conv_w(k, out_c, in_c):
        bound = 1.0 / (in_c ** 0.5)
        return jax.random.uniform(k, (out_c, in_c), jnp.float32, -bound, bound)

    def conv_b(k, out_c, in_c):
        bound = 1.0 / (in_c ** 0.5)
        return jax.random.uniform(k, (1, out_c), jnp.float32, -bound, bound)

    return {
        # k_layer / q_layer: Conv2d(in_dim, attention_dim, 1)
        "wk": conv_w(ks[0], attention_dim, in_dim),
        "bk": conv_b(ks[1], attention_dim, in_dim),
        "wq": conv_w(ks[2], attention_dim, in_dim),
        "bq": conv_b(ks[3], attention_dim, in_dim),
        # out_layer: Conv2d(num_class, num_class, 1)
        "wo": conv_w(ks[4], num_class, num_class),
        "bo": conv_b(ks[5], num_class, num_class),
        # BatchNorm2d(num_class), PyTorch default init (eval mode)
        "bn_gamma": jnp.ones((1, num_class), jnp.float32),
        "bn_beta": jnp.zeros((1, num_class), jnp.float32),
        "bn_mean": jnp.zeros((1, num_class), jnp.float32),
        "bn_var": jnp.ones((1, num_class), jnp.float32),
    }


if __name__ == "__main__":
    key = jax.random.PRNGKey(0)
    k_logits, k_hyper, k_params = jax.random.split(key, 3)

    B, H, W = 2, 8, 8
    num_class, in_dim, attention_dim = 5, 32, 128
    # logits has num_class - 1 channels so the background-concat branch runs.
    logits = jax.random.normal(k_logits, (B, num_class - 1, H, W), jnp.float32)
    hypercolumn = jax.random.normal(k_hyper, (B, in_dim, H, W), jnp.float32)

    params = init_params(k_params, num_class, in_dim, attention_dim)

    out = self_attention_cam_forward(
        logits, hypercolumn, params,
        num_class=num_class, attention_dim=attention_dim)
    out = jax.block_until_ready(out)

    assert out.shape == (B, num_class, H, W), out.shape
    assert jnp.all(jnp.isfinite(out))
    print("KERNEL_OK")
</pallas_src>

<mosaic_0001>
module attributes {stable_mosaic.version = 11 : i64} {
  func.func @_qk_proj_kernel(%arg0: i32, %arg1: i32, %arg2: memref<1x64x32xbf16, #tpu.memory_space<vmem>>, %arg3: memref<32x128xbf16, #tpu.memory_space<vmem>>, %arg4: memref<1x128xf32, #tpu.memory_space<vmem>>, %arg5: memref<32x128xbf16, #tpu.memory_space<vmem>>, %arg6: memref<1x128xf32, #tpu.memory_space<vmem>>, %arg7: memref<1x64x128xbf16, #tpu.memory_space<vmem>>, %arg8: memref<1x64x128xbf16, #tpu.memory_space<vmem>>) attributes {dimension_semantics = [#tpu.dimension_semantics<parallel>, #tpu.dimension_semantics<parallel>], iteration_bounds = array<i64: 2, 1>, scalar_prefetch = 0 : i64, scratch_operands = 0 : i64, tpu.core_type = #tpu.core_type<tc>, window_params = [{transform_indices = @transform_0, window_bounds = array<i64: 1, 64, 32>}, {pipeline_mode = #tpu.pipeline_mode<synchronous>, transform_indices = @transform_1, window_bounds = array<i64: 32, 128>}, {pipeline_mode = #tpu.pipeline_mode<synchronous>, transform_indices = @transform_2, window_bounds = array<i64: 1, 128>}, {pipeline_mode = #tpu.pipeline_mode<synchronous>, transform_indices = @transform_3, window_bounds = array<i64: 32, 128>}, {pipeline_mode = #tpu.pipeline_mode<synchronous>, transform_indices = @transform_4, window_bounds = array<i64: 1, 128>}, {transform_indices = @transform_5, window_bounds = array<i64: 1, 64, 128>}, {transform_indices = @transform_6, window_bounds = array<i64: 1, 64, 128>}]} {
    %c0 = arith.constant 0 : index
    %c0_0 = arith.constant 0 : index
    %c0_1 = arith.constant 0 : index
    %0 = vector.load %arg2[%c0, %c0_0, %c0_1] : memref<1x64x32xbf16, #tpu.memory_space<vmem>>, vector<1x64x32xbf16>
    %1 = vector.shape_cast %0 : vector<1x64x32xbf16> to vector<64x32xbf16>
    %c0_2 = arith.constant 0 : index
    %c0_3 = arith.constant 0 : index
    %2 = vector.load %arg3[%c0_2, %c0_3] : memref<32x128xbf16, #tpu.memory_space<vmem>>, vector<32x128xbf16>
    %cst = arith.constant dense<0.000000e+00> : vector<64x128xf32>
    %3 = tpu.matmul %1, %2, %cst {dimension_numbers = #tpu.dot_dimension_numbers<[1], [0], [0], [1], [0, 0, 1, 1], [], []>} : vector<64x32xbf16>, vector<32x128xbf16>, vector<64x128xf32> -> vector<64x128xf32>
    %c0_4 = arith.constant 0 : index
    %c0_5 = arith.constant 0 : index
    %4 = vector.load %arg4[%c0_4, %c0_5] : memref<1x128xf32, #tpu.memory_space<vmem>>, vector<1x128xf32>
    %5 = vector.broadcast %4 : vector<1x128xf32> to vector<64x128xf32>
    %6 = arith.addf %3, %5 : vector<64x128xf32>
    %c0_6 = arith.constant 0 : index
    %c0_7 = arith.constant 0 : index
    %7 = vector.load %arg5[%c0_6, %c0_7] : memref<32x128xbf16, #tpu.memory_space<vmem>>, vector<32x128xbf16>
    %cst_8 = arith.constant dense<0.000000e+00> : vector<64x128xf32>
    %8 = tpu.matmul %1, %7, %cst_8 {dimension_numbers = #tpu.dot_dimension_numbers<[1], [0], [0], [1], [0, 0, 1, 1], [], []>} : vector<64x32xbf16>, vector<32x128xbf16>, vector<64x128xf32> -> vector<64x128xf32>
    %c0_9 = arith.constant 0 : index
    %c0_10 = arith.constant 0 : index
    %9 = vector.load %arg6[%c0_9, %c0_10] : memref<1x128xf32, #tpu.memory_space<vmem>>, vector<1x128xf32>
    %10 = vector.broadcast %9 : vector<1x128xf32> to vector<64x128xf32>
    %11 = arith.addf %8, %10 : vector<64x128xf32>
    %12 = arith.truncf %6 : vector<64x128xf32> to vector<64x128xbf16>
    %c0_11 = arith.constant 0 : index
    %c0_12 = arith.constant 0 : index
    %c0_13 = arith.constant 0 : index
    %13 = vector.load %arg7[%c0_11, %c0_12, %c0_13] : memref<1x64x128xbf16, #tpu.memory_space<vmem>>, vector<1x64x128xbf16>
    %14 = vector.shape_cast %13 : vector<1x64x128xbf16> to vector<64x128xbf16>
    %15 = vector.shape_cast %12 : vector<64x128xbf16> to vector<1x64x128xbf16>
    tpu.vector_store %arg7[%c0_11, %c0_12, %c0_13], %15 {strides = array<i32>} : memref<1x64x128xbf16, #tpu.memory_space<vmem>>, vector<1x64x128xbf16>,
    %16 = arith.truncf %11 : vector<64x128xf32> to vector<64x128xbf16>
    %c0_14 = arith.constant 0 : index
    %c0_15 = arith.constant 0 : index
    %c0_16 = arith.constant 0 : index
    %17 = vector.load %arg8[%c0_14, %c0_15, %c0_16] : memref<1x64x128xbf16, #tpu.memory_space<vmem>>, vector<1x64x128xbf16>
    %18 = vector.shape_cast %17 : vector<1x64x128xbf16> to vector<64x128xbf16>
    %19 = vector.shape_cast %16 : vector<64x128xbf16> to vector<1x64x128xbf16>
    tpu.vector_store %arg8[%c0_14, %c0_15, %c0_16], %19 {strides = array<i32>} : memref<1x64x128xbf16, #tpu.memory_space<vmem>>, vector<1x64x128xbf16>,
    return
  }
  func.func @transform_0(%arg0: i32, %arg1: i32) -> (i32, i32, i32) {
    %c0_i32 = arith.constant 0 : i32
    %c0_i32_0 = arith.constant 0 : i32
    return %arg0, %arg1, %c0_i32 : i32, i32, i32
  }
  func.func @transform_1(%arg0: i32, %arg1: i32) -> (i32, i32) {
    %c0_i32 = arith.constant 0 : i32
    %c0_i32_0 = arith.constant 0 : i32
    %c0_i32_1 = arith.constant 0 : i32
    return %c0_i32, %c0_i32_0 : i32, i32
  }
  func.func @transform_2(%arg0: i32, %arg1: i32) -> (i32, i32) {
    %c0_i32 = arith.constant 0 : i32
    %c0_i32_0 = arith.constant 0 : i32
    %c0_i32_1 = arith.constant 0 : i32
    return %c0_i32, %c0_i32_0 : i32, i32
  }
  func.func @transform_3(%arg0: i32, %arg1: i32) -> (i32, i32) {
    %c0_i32 = arith.constant 0 : i32
    %c0_i32_0 = arith.constant 0 : i32
    %c0_i32_1 = arith.constant 0 : i32
    return %c0_i32, %c0_i32_0 : i32, i32
  }
  func.func @transform_4(%arg0: i32, %arg1: i32) -> (i32, i32) {
    %c0_i32 = arith.constant 0 : i32
    %c0_i32_0 = arith.constant 0 : i32
    %c0_i32_1 = arith.constant 0 : i32
    return %c0_i32, %c0_i32_0 : i32, i32
  }
  func.func @transform_5(%arg0: i32, %arg1: i32) -> (i32, i32, i32) {
    %c0_i32 = arith.constant 0 : i32
    %c0_i32_0 = arith.constant 0 : i32
    return %arg0, %arg1, %c0_i32 : i32, i32, i32
  }
  func.func @transform_6(%arg0: i32, %arg1: i32) -> (i32, i32, i32) {
    %c0_i32 = arith.constant 0 : i32
    %c0_i32_0 = arith.constant 0 : i32
    return %arg0, %arg1, %c0_i32 : i32, i32, i32
  }
}

</mosaic_0001>

<llo_original>
// kernel: tpu_custom_call.1
$region0: #{tpu_custom_call.1}
  #allocation0 [shape = 'u32[]', space=smem, size = 0x4, offset = 0x4, fixed_abs, tag = 'smem constant byte address 0x4 - core index']
  #allocation1 [shape = 'u32[144,128]{1,0:T(1,128)}', space=vmem, size = 0x12000, scoped, tag = 'internal scratch']
  %s0 = inlined_call_operand.vmem [shape: bf16[2,64,32], index: 0, kind: input, shape index: {}]
  %s1 = inlined_call_operand.vmem [shape: bf16[32,128], index: 1, kind: input, shape index: {}]
  %s2 = inlined_call_operand.vmem [shape: f32[1,128], index: 2, kind: input, shape index: {}]
  %s3 = inlined_call_operand.vmem [shape: bf16[32,128], index: 3, kind: input, shape index: {}]
  %s4 = inlined_call_operand.vmem [shape: f32[1,128], index: 4, kind: input, shape index: {}]
  %s5 = inlined_call_operand.hbm [shape: bf16[2,64,128], index: 5, kind: output, shape index: {0}]
  %s6 = inlined_call_operand.hbm [shape: bf16[2,64,128], index: 6, kind: output, shape index: {1}]
  %7 = xla_tuple %s5, %s6
  %s8 = sld [smem:[#allocation0]]
  $region61: #{tpu_custom_call.1} parent=0
    _
  %s10 = ssub.s32 1, %s8
  %s11 = scalar_select 0, %s10, %s8
  $region1: #{tpu_custom_call.1} parent=0
    #allocation2 [shape = 'u8[32768]{0}', space=vmem, size = 0x8000, scoped, tag = 'output window, operand 0']
    #allocation3 [shape = 's32[2]{0}', space=sflag, size = 0x8, scoped, tag = 'scoped memory for tpu_custom_call.1']
    #allocation4 [shape = 'u8[32768]{0}', space=vmem, size = 0x8000, scoped, tag = 'output window, operand 1']
    #allocation5 [shape = 's32[2]{0}', space=sflag, size = 0x8, scoped, tag = 'scoped memory for tpu_custom_call.1']
    %12 = vsyncpa [#allocation3], 0
    %s13 = scalar_lea.sflag [#allocation3], 1
    %14 = vsyncpa %s13, 0
    %15 = vsyncpa [#allocation5], 0
    %s16 = scalar_lea.sflag [#allocation5], 1
    %17 = vsyncpa %s16, 0
    loop: start=0, step=1, limit=4
    $region2: #{tpu_custom_call.1} parent=1 // loop_pre_header
      _
    $region3: #{tpu_custom_call.1} parent=1 // loop_header
      %s19 = sphi 0, %s23
      %p20 = scmp.ge.s32.totalorder %s19, 4
      %s26 = sphi 0, %s38
      %s27 = sphi 0, %s34
      %s28 = sphi 0, %s26
      %s29 = sphi 0, %s27
      %s30 = sphi 0, %s28
      %s31 = sphi 0, %s29
      %s43 = sphi 0, %s45
      %s46 = sphi 0, %s43
      %s47 = sphi 0, %s46
      %s63 = sphi 0, %s47
      %s67 = sphi 0, %s67
      %s69 = sphi 0, %s67
      %s70 = sphi 0, %s69
      %s84 = sphi 0, %s70
      %s88 = sphi 0, %s88
      %s90 = sphi 0, %s88
      %s91 = sphi 0, %s90
      %s105 = sphi 0, %s91
      %s109 = sphi 0, %s109
      %s111 = sphi 0, %s109
      %s112 = sphi 0, %s111
      %s126 = sphi 0, %s112
      %s130 = sphi 0, %s130
      %s132 = sphi 0, %s130
      %s133 = sphi 0, %s132
      %s147 = sphi 0, %s133
      %s155 = sphi 0, %s157
      %s158 = sphi 0, %s155
      %s159 = sphi 0, %s158
      %s175 = sphi 0, %s159
      %s183 = sphi 0, %s185
      %s186 = sphi 0, %s183
      %s187 = sphi 0, %s186
      %s203 = sphi 0, %s187
    $region4: #{tpu_custom_call.1} parent=1 // loop_header_branch
      %22 = sbr.rel (%p20) target = $region8
    $region5: #{tpu_custom_call.1} parent=1 // loop_body
      %s24 = ssub.s32 %s19, 1
      %s25 = ssub.s32 %s19, 2
      %s32 = sadd.s32 1, %s27
      %p33 = scmp.ge.s32.totalorder %s32, 1
      %s34 = scalar_select %p33, 0, %s32
      %s35 = sadd.s32 1, %s26
      %s36 = scalar_select %p33, %s35, %s26
      %p37 = scmp.ge.s32.totalorder %s36, 2
      %s38 = scalar_select %p37, 0, %s36
      %s39 = ssub.s32 %s26, %s38
      %s40 = ssub.s32 %s27, %s34
      %s41 = sor.u32 %s39, %s40
      %p42 = scmp.eq.s32.totalorder %s41, 0
      %s44 = sadd.s32 %s43, 1
      %s45 = scalar_select %p42, %s43, %s44
      %p48 = pneg %p42
      %p49 = scmp.eq.s32.totalorder %s19, 1
      %p50 = por %p48, %p49
      %p51 = scmp.ne.s32.totalorder %s43, %s46
      %p52 = scmp.eq.s32.totalorder %s19, 0
      %p53 = por %p51, %p52
      %p54 = scmp.ne.s32.totalorder %s43, %s46
      %p55 = scmp.eq.s32.totalorder %s24, 1
      %p56 = por %p54, %p55
      %p57 = scmp.ne.s32.totalorder %s46, %s47
      %p58 = scmp.eq.s32.totalorder %s24, 0
      %p59 = por %p57, %p58
      %p60 = scmp.ne.s32.totalorder %s46, %s47
      %p61 = scmp.eq.s32.totalorder %s25, 1
      %p62 = por %p60, %p61
      %p64 = scmp.ne.s32.totalorder %s47, %s63
      %p65 = scmp.eq.s32.totalorder %s25, 0
      %p66 = por %p64, %p65
      %s68 = sadd.s32 %s67, 1
      %p71 = scmp.eq.s32.totalorder %s19, 1
      %p72 = scmp.ne.s32.totalorder %s67, %s69
      %p73 = scmp.eq.s32.totalorder %s19, 0
      %p74 = por %p72, %p73
      %p75 = scmp.ne.s32.totalorder %s67, %s69
      %p76 = scmp.eq.s32.totalorder %s24, 1
      %p77 = por %p75, %p76
      %p78 = scmp.ne.s32.totalorder %s69, %s70
      %p79 = scmp.eq.s32.totalorder %s24, 0
      %p80 = por %p78, %p79
      %p81 = scmp.ne.s32.totalorder %s69, %s70
      %p82 = scmp.eq.s32.totalorder %s25, 1
      %p83 = por %p81, %p82
      %p85 = scmp.ne.s32.totalorder %s70, %s84
      %p86 = scmp.eq.s32.totalorder %s25, 0
      %p87 = por %p85, %p86
      %s89 = sadd.s32 %s88, 1
      %p92 = scmp.eq.s32.totalorder %s19, 1
      %p93 = scmp.ne.s32.totalorder %s88, %s90
      %p94 = scmp.eq.s32.totalorder %s19, 0
      %p95 = por %p93, %p94
      %p96 = scmp.ne.s32.totalorder %s88, %s90
      %p97 = scmp.eq.s32.totalorder %s24, 1
      %p98 = por %p96, %p97
      %p99 = scmp.ne.s32.totalorder %s90, %s91
      %p100 = scmp.eq.s32.totalorder %s24, 0
      %p101 = por %p99, %p100
      %p102 = scmp.ne.s32.totalorder %s90, %s91
      %p103 = scmp.eq.s32.totalorder %s25, 1
      %p104 = por %p102, %p103
      %p106 = scmp.ne.s32.totalorder %s91, %s105
      %p107 = scmp.eq.s32.totalorder %s25, 0
      %p108 = por %p106, %p107
      %s110 = sadd.s32 %s109, 1
      %p113 = scmp.eq.s32.totalorder %s19, 1
      %p114 = scmp.ne.s32.totalorder %s109, %s111
      %p115 = scmp.eq.s32.totalorder %s19, 0
      %p116 = por %p114, %p115
      %p117 = scmp.ne.s32.totalorder %s109, %s111
      %p118 = scmp.eq.s32.totalorder %s24, 1
      %p119 = por %p117, %p118
      %p120 = scmp.ne.s32.totalorder %s111, %s112
      %p121 = scmp.eq.s32.totalorder %s24, 0
      %p122 = por %p120, %p121
      %p123 = scmp.ne.s32.totalorder %s111, %s112
      %p124 = scmp.eq.s32.totalorder %s25, 1
      %p125 = por %p123, %p124
      %p127 = scmp.ne.s32.totalorder %s112, %s126
      %p128 = scmp.eq.s32.totalorder %s25, 0
      %p129 = por %p127, %p128
      %s131 = sadd.s32 %s130, 1
      %p134 = scmp.eq.s32.totalorder %s19, 1
      %p135 = scmp.ne.s32.totalorder %s130, %s132
      %p136 = scmp.eq.s32.totalorder %s19, 0
      %p137 = por %p135, %p136
      %p138 = scmp.ne.s32.totalorder %s130, %s132
      %p139 = scmp.eq.s32.totalorder %s24, 1
      %p140 = por %p138, %p139
      %p141 = scmp.ne.s32.totalorder %s132, %s133
      %p142 = scmp.eq.s32.totalorder %s24, 0
      %p143 = por %p141, %p142
      %p144 = scmp.ne.s32.totalorder %s132, %s133
      %p145 = scmp.eq.s32.totalorder %s25, 1
      %p146 = por %p144, %p145
      %p148 = scmp.ne.s32.totalorder %s133, %s147
      %p149 = scmp.eq.s32.totalorder %s25, 0
      %p150 = por %p148, %p149
      %s151 = ssub.s32 %s26, %s38
      %s152 = ssub.s32 %s27, %s34
      %s153 = sor.u32 %s151, %s152
      %p154 = scmp.eq.s32.totalorder %s153, 0
      %s156 = sadd.s32 %s155, 1
      %s157 = scalar_select %p154, %s155, %s156
      %p160 = pneg %p154
      %p161 = scmp.eq.s32.totalorder %s19, 1
      %p162 = por %p160, %p161
      %p163 = scmp.ne.s32.totalorder %s155, %s158
      %p164 = scmp.eq.s32.totalorder %s19, 0
      %p165 = por %p163, %p164
      %p166 = scmp.ne.s32.totalorder %s155, %s158
      %p167 = scmp.eq.s32.totalorder %s24, 1
      %p168 = por %p166, %p167
      %p169 = scmp.ne.s32.totalorder %s158, %s159
      %p170 = scmp.eq.s32.totalorder %s24, 0
      %p171 = por %p169, %p170
      %p172 = scmp.ne.s32.totalorder %s158, %s159
      %p173 = scmp.eq.s32.totalorder %s25, 1
      %p174 = por %p172, %p173
      %p176 = scmp.ne.s32.totalorder %s159, %s175
      %p177 = scmp.eq.s32.totalorder %s25, 0
      %p178 = por %p176, %p177
      %s179 = ssub.s32 %s26, %s38
      %s180 = ssub.s32 %s27, %s34
      %s181 = sor.u32 %s179, %s180
      %p182 = scmp.eq.s32.totalorder %s181, 0
      %s184 = sadd.s32 %s183, 1
      %s185 = scalar_select %p182, %s183, %s184
      %p188 = pneg %p182
      %p189 = scmp.eq.s32.totalorder %s19, 1
      %p190 = por %p188, %p189
      %p191 = scmp.ne.s32.totalorder %s183, %s186
      %p192 = scmp.eq.s32.totalorder %s19, 0
      %p193 = por %p191, %p192
      %p194 = scmp.ne.s32.totalorder %s183, %s186
      %p195 = scmp.eq.s32.totalorder %s24, 1
      %p196 = por %p194, %p195
      %p197 = scmp.ne.s32.totalorder %s186, %s187
      %p198 = scmp.eq.s32.totalorder %s24, 0
      %p199 = por %p197, %p198
      %p200 = scmp.ne.s32.totalorder %s186, %s187
      %p201 = scmp.eq.s32.totalorder %s25, 1
      %p202 = por %p200, %p201
      %p204 = scmp.ne.s32.totalorder %s187, %s203
      %p205 = scmp.eq.s32.totalorder %s25, 0
      %p206 = por %p204, %p205
      %p207 = scmp.le.s32.totalorder 1, %s19
      %p208 = scmp.lt.s32.totalorder %s19, 3
      %p209 = pnand %p207, %p208
      %p210 = pneg %p209
      // Predicated region
      $region9: #{tpu_custom_call.1} parent=5 // pred_check
        _
      $region10: #{tpu_custom_call.1} parent=5 // pred_check_branch
        %212 = sbr.rel (%p209) target = $region12
      $region11: #{tpu_custom_call.1} parent=5 // pred_region
        %s213 = ssub.s32 %s19, 1
        // Predicated region
        $region13: #{tpu_custom_call.1} parent=11 // pred_check
          %p214 = pneg %p80
        $region14: #{tpu_custom_call.1} parent=11 // pred_check_branch
          %216 = sbr.rel (%p214) target = $region16
        $region15: #{tpu_custom_call.1} parent=11 // pred_region
          _
        $region16: #{tpu_custom_call.1} parent=11 // pred_fallthru
          _
        // Predicated region
        $region17: #{tpu_custom_call.1} parent=11 // pred_check
          %p217 = pneg %p101
        $region18: #{tpu_custom_call.1} parent=11 // pred_check_branch
          %219 = sbr.rel (%p217) target = $region20
        $region19: #{tpu_custom_call.1} parent=11 // pred_region
          _
        $region20: #{tpu_custom_call.1} parent=11 // pred_fallthru
          _
        // Predicated region
        $region21: #{tpu_custom_call.1} parent=11 // pred_check
          %p220 = pneg %p122
        $region22: #{tpu_custom_call.1} parent=11 // pred_check_branch
          %222 = sbr.rel (%p220) target = $region24
        $region23: #{tpu_custom_call.1} parent=11 // pred_region
          _
        $region24: #{tpu_custom_call.1} parent=11 // pred_fallthru
          _
        // Predicated region
        $region25: #{tpu_custom_call.1} parent=11 // pred_check
          %p223 = pneg %p143
        $region26: #{tpu_custom_call.1} parent=11 // pred_check_branch
          %225 = sbr.rel (%p223) target = $region28
        $region27: #{tpu_custom_call.1} parent=11 // pred_region
          _
        $region28: #{tpu_custom_call.1} parent=11 // pred_fallthru
          _
      $region12: #{tpu_custom_call.1} parent=5 // pred_fallthru
        _
      %p226 = scmp.lt.s32.totalorder %s19, 2
      // Predicated region
      $region29: #{tpu_custom_call.1} parent=5 // pred_check
        %p227 = pneg %p226
      $region30: #{tpu_custom_call.1} parent=5 // pred_check_branch
        %229 = sbr.rel (%p227) target = $region32
      $region31: #{tpu_custom_call.1} parent=5 // pred_region
        // Predicated region
        $region33: #{tpu_custom_call.1} parent=31 // pred_check
          %p230 = pneg %p53
        $region34: #{tpu_custom_call.1} parent=31 // pred_check_branch
          %232 = sbr.rel (%p230) target = $region36
        $region35: #{tpu_custom_call.1} parent=31 // pred_region
          %s233 = smul.u32 8, %s27
          %p234 = scmp.lt.s32.totalorder %s26, 1
          %s235 = scalar_select %p234, %s26, 1
          %p236 = scmp.lt.s32.totalorder %s233, 7
          %s237 = scalar_select %p236, %s233, 7
          %s238 = smul.addr %s235, 8
          %s239 = sadd.s32 %s237, %s238
          %s240 = smul.addr %s239, 4
          %s241 = scalar_lea.vmem %s0, %s240
          %s242 = smul.u32 8, %s27
        $region36: #{tpu_custom_call.1} parent=31 // pred_fallthru
          _
      $region32: #{tpu_custom_call.1} parent=5 // pred_fallthru
        _
      %p243 = scmp.le.s32.totalorder 1, %s19
      %p244 = scmp.lt.s32.totalorder %s19, 3
      %p245 = pnand %p243, %p244
      %p246 = pneg %p245
      // Predicated region
      $region37: #{tpu_custom_call.1} parent=5 // pred_check
        _
      $region38: #{tpu_custom_call.1} parent=5 // pred_check_branch
        %248 = sbr.rel (%p245) target = $region40
      $region39: #{tpu_custom_call.1} parent=5 // pred_region
        %s249 = ssub.s32 %s19, 1
        %s250 = smul.u32 8, %s29
        %p251 = scmp.lt.s32.totalorder %s28, 1
        %s252 = scalar_select %p251, %s28, 1
        %p253 = scmp.lt.s32.totalorder %s250, 7
        %s254 = scalar_select %p253, %s250, 7
        %s255 = smul.addr %s252, 8
        %s256 = sadd.s32 %s254, %s255
        %s257 = smul.addr %s256, 4
        %s258 = scalar_lea.vmem %s0, %s257
        %p259 = pneg %p59
        %p260 = pneg %p56
        %p261 = pneg %p80
        %p262 = pneg %p77
        %p263 = pneg %p101
        %p264 = pneg %p98
        %p265 = pneg %p122
        %p266 = pneg %p119
        %p267 = pneg %p143
        %p268 = pneg %p140
        %p269 = pneg %p171
        %p270 = pneg %p168
        %s271 = sand.u32 %s158, 1
        %s272 = scalar_lea.sflag [#allocation3], %s271
        %s273 = sand.u32 %s158, 1
        %s274 = smul.addr %s273, 32
        %s275 = scalar_lea.vmem [#allocation2], %s274
        %p276 = pneg %p199
        %p277 = pneg %p196
        %s278 = sand.u32 %s186, 1
        %s279 = scalar_lea.sflag [#allocation5], %s278
        %s280 = sand.u32 %s186, 1
        %s281 = smul.addr %s280, 32
        %s282 = scalar_lea.vmem [#allocation4], %s281
        %s283 = smul.u32 8, %s29
        %p284 = scmp.lt.s32.totalorder %s28, 1
        %s285 = scalar_select %p284, %s28, 1
        %p286 = scmp.lt.s32.totalorder %s283, 7
        %s287 = scalar_select %p286, %s283, 7
        %s288 = smul.addr %s285, 8
        %s289 = sadd.s32 %s287, %s288
        %s290 = smul.addr %s289, 4
        %s291 = scalar_lea.vmem %s0, %s290
        %s292 = smul.u32 8, %s29
        %s293 = smul.u32 8, %s29
        %s294 = smul.u32 8, %s29
        %v296 = vld [vmem:[%s291] sm:$0xf]
        %v297 = vld [vmem:[%s291 + $0x4] sm:$0xf]
        %v298 = vld [vmem:[%s291 + $0x8] sm:$0xf]
        %v299 = vld [vmem:[%s291 + $0xc] sm:$0xf]
        %v300 = vld [vmem:[%s291 + $0x10] sm:$0xf]
        %v301 = vld [vmem:[%s291 + $0x14] sm:$0xf]
        %v302 = vld [vmem:[%s291 + $0x18] sm:$0xf]
        %v303 = vld [vmem:[%s291 + $0x1c] sm:$0xf]
        %v304 = vld [vmem:[%s1] sm:$0xf]
        %v305 = vld [vmem:[%s1 + $0x4] sm:$0xf]
        %v306 = vld [vmem:[%s1 + $0x8] sm:$0xf]
        %v307 = vld [vmem:[%s1 + $0xc] sm:$0xf]
        %v308 = vld [vmem:[%s2] sm:$0x1]
        %v310 = vlaneseq
        %v311 = vshrl.u32 %v310, 7
        %v312 = vsub.s32 0, %v311
        %v313 = vrot.slane %v308, %v312
        %v323 = vunpack.c.l.b16 %v296
        %v324 = vunpack.c.l.b16 %v297
        %v325 = vunpack.c.l.b16 %v298
        %v326 = vunpack.c.l.b16 %v299
        %v327 = vunpack.c.l.b16 %v300
        %v328 = vunpack.c.l.b16 %v301
        %v329 = vunpack.c.l.b16 %v302
        %v330 = vunpack.c.l.b16 %v303
        %v331 = vpack.c.b16 %v324, %v323
        %v332 = vpack.c.b16 %v326, %v325
        %v333 = vpack.c.b16 %v328, %v327
        %v334 = vpack.c.b16 %v330, %v329
        %v339 = vunpack.c.l.b16 %v304
        %v340 = vunpack.c.l.b16 %v305
        %v341 = vunpack.c.l.b16 %v306
        %v342 = vunpack.c.l.b16 %v307
        %v343 = vpack.c.b16 %v340, %v339
        %v344 = vpack.c.b16 %v342, %v341
        %vm347 = vcmask 261120
        %v349 = vsel %vm347, %v331, 0
        %v352 = vsel %vm347, %v332, 0
        %v355 = vsel %vm347, %v333, 0
        %v358 = vsel %vm347, %v334, 0
        %360 = vmatprep.subr.bf16.mxu0 0
        %361 = vmatpush1.bf16.msra.mxu0 %v343
        %362 = vmatprep.subr.bf16.mxu0 0
        %363 = vmatpush1.bf16.msra.mxu0 %v344
        %364 = vmatprep.subr.bf16.mxu0 0
        %365 = vmatpush1.bf16.msra.mxu0 0
        %366 = vmatprep.subr.bf16.mxu0 0
        %367 = vmatpush1.bf16.msra.mxu0 0
        %368 = vmatprep.subr.bf16.mxu0 0
        %369 = vmatpush1.bf16.msra.mxu0 0
        %370 = vmatprep.subr.bf16.mxu0 0
        %371 = vmatpush1.bf16.msra.mxu0 0
        %372 = vmatprep.subr.bf16.mxu0 0
        %373 = vmatpush1.bf16.msra.mxu0 0
        %374 = vmatprep.subr.bf16.mxu0 0
        %375 = vmatpush1.bf16.msra.mxu0 0
        %376 = vmatprep.subr.bf16.mxu0 0
        %377 = vmatpush1.bf16.msra.mxu0 0
        %378 = vmatprep.subr.bf16.mxu0 0
        %379 = vmatpush1.bf16.msra.mxu0 0
        %380 = vmatprep.subr.bf16.mxu0 0
        %381 = vmatpush1.bf16.msra.mxu0 0
        %382 = vmatprep.subr.bf16.mxu0 0
        %383 = vmatpush1.bf16.msra.mxu0 0
        %384 = vmatprep.subr.bf16.mxu0 0
        %385 = vmatpush1.bf16.msra.mxu0 0
        %386 = vmatprep.subr.bf16.mxu0 0
        %387 = vmatpush1.bf16.msra.mxu0 0
        %388 = vmatprep.subr.bf16.mxu0 0
        %389 = vmatpush1.bf16.msra.mxu0 0
        %390 = vmatprep.subr.bf16.mxu0 0
        %391 = vmatpush1.bf16.msra.mxu0 0
        %392 = vmatprep.mubr.bf16.mxu0 0
        %393 = vmatmul.mubr.bf16.gmra.mrb[0].mxu0 %v349
        %v394 = vpop.f32.mrb[0].mxu0
        %v395 = vadd.f32 %v313, %v394
        %v396 = vpop.f32.mrb[0].mxu0
        %v397 = vpop.f32.mrb[0].mxu0
        %v398 = vadd.f32 %v313, %v397
        %v399 = vpop.f32.mrb[0].mxu0
        %400 = vmatprep.mubr.bf16.mxu0 0
        %401 = vmatmul.mubr.bf16.gmra.mrb[0].mxu0 %v352
        %v402 = vpop.f32.mrb[0].mxu0
        %v403 = vadd.f32 %v313, %v402
        %v404 = vpop.f32.mrb[0].mxu0
        %v405 = vpop.f32.mrb[0].mxu0
        %v406 = vadd.f32 %v313, %v405
        %v407 = vpop.f32.mrb[0].mxu0
        %408 = vmatprep.mubr.bf16.mxu0 0
        %409 = vmatmul.mubr.bf16.gmra.mrb[0].mxu0 %v355
        %v410 = vpop.f32.mrb[0].mxu0
        %v411 = vadd.f32 %v313, %v410
        %v412 = vpop.f32.mrb[0].mxu0
        %v413 = vpop.f32.mrb[0].mxu0
        %v414 = vadd.f32 %v313, %v413
        %v415 = vpop.f32.mrb[0].mxu0
        %416 = vmatprep.mubr.bf16.mxu0 0
        %417 = vmatmul.mubr.bf16.gmra.mrb[0].mxu0 %v358
        %v418 = vpop.f32.mrb[0].mxu0
        %v419 = vadd.f32 %v313, %v418
        %v420 = vpop.f32.mrb[0].mxu0
        %v421 = vpop.f32.mrb[0].mxu0
        %v422 = vadd.f32 %v313, %v421
        %v423 = vpop.f32.mrb[0].mxu0
        %424 = vdwg.mxu0
        %v425 = vld [vmem:[%s3] sm:$0xf]
        %v426 = vld [vmem:[%s3 + $0x4] sm:$0xf]
        %v427 = vld [vmem:[%s3 + $0x8] sm:$0xf]
        %v428 = vld [vmem:[%s3 + $0xc] sm:$0xf]
        %v429 = vld [vmem:[%s4] sm:$0x1]
        %v431 = vlaneseq
        %v432 = vshrl.u32 %v431, 7
        %v433 = vsub.s32 0, %v432
        %v434 = vrot.slane %v429, %v433
        %v440 = vunpack.c.l.b16 %v425
        %v441 = vunpack.c.l.b16 %v426
        %v442 = vunpack.c.l.b16 %v427
        %v443 = vunpack.c.l.b16 %v428
        %v444 = vpack.c.b16 %v441, %v440
        %v445 = vpack.c.b16 %v443, %v442
        %448 = vmatprep.subr.bf16.mxu0 0
        %449 = vmatpush1.bf16.msra.mxu0 %v444
        %450 = vmatprep.subr.bf16.mxu0 0
        %451 = vmatpush1.bf16.msra.mxu0 %v445
        %452 = vmatprep.subr.bf16.mxu0 0
        %453 = vmatpush1.bf16.msra.mxu0 0
        %454 = vmatprep.subr.bf16.mxu0 0
        %455 = vmatpush1.bf16.msra.mxu0 0
        %456 = vmatprep.subr.bf16.mxu0 0
        %457 = vmatpush1.bf16.msra.mxu0 0
        %458 = vmatprep.subr.bf16.mxu0 0
        %459 = vmatpush1.bf16.msra.mxu0 0
        %460 = vmatprep.subr.bf16.mxu0 0
        %461 = vmatpush1.bf16.msra.mxu0 0
        %462 = vmatprep.subr.bf16.mxu0 0
        %463 = vmatpush1.bf16.msra.mxu0 0
        %464 = vmatprep.subr.bf16.mxu0 0
        %465 = vmatpush1.bf16.msra.mxu0 0
        %466 = vmatprep.subr.bf16.mxu0 0
        %467 = vmatpush1.bf16.msra.mxu0 0
        %468 = vmatprep.subr.bf16.mxu0 0
        %469 = vmatpush1.bf16.msra.mxu0 0
        %470 = vmatprep.subr.bf16.mxu0 0
        %471 = vmatpush1.bf16.msra.mxu0 0
        %472 = vmatprep.subr.bf16.mxu0 0
        %473 = vmatpush1.bf16.msra.mxu0 0
        %474 = vmatprep.subr.bf16.mxu0 0
        %475 = vmatpush1.bf16.msra.mxu0 0
        %476 = vmatprep.subr.bf16.mxu0 0
        %477 = vmatpush1.bf16.msra.mxu0 0
        %478 = vmatprep.subr.bf16.mxu0 0
        %479 = vmatpush1.bf16.msra.mxu0 0
        %480 = vmatprep.mubr.bf16.mxu0 0
        %481 = vmatmul.mubr.bf16.gmra.mrb[0].mxu0 %v349
        %v482 = vpop.f32.mrb[0].mxu0
        %v483 = vadd.f32 %v434, %v482
        %v484 = vpop.f32.mrb[0].mxu0
        %v485 = vpop.f32.mrb[0].mxu0
        %v486 = vadd.f32 %v434, %v485
        %v487 = vpop.f32.mrb[0].mxu0
        %488 = vmatprep.mubr.bf16.mxu0 0
        %489 = vmatmul.mubr.bf16.gmra.mrb[0].mxu0 %v352
        %v490 = vpop.f32.mrb[0].mxu0
        %v491 = vadd.f32 %v434, %v490
        %v492 = vpop.f32.mrb[0].mxu0
        %v493 = vpop.f32.mrb[0].mxu0
        %v494 = vadd.f32 %v434, %v493
        %v495 = vpop.f32.mrb[0].mxu0
        %496 = vmatprep.mubr.bf16.mxu0 0
        %497 = vmatmul.mubr.bf16.gmra.mrb[0].mxu0 %v355
        %v498 = vpop.f32.mrb[0].mxu0
        %v499 = vadd.f32 %v434, %v498
        %v500 = vpop.f32.mrb[0].mxu0
        %v501 = vpop.f32.mrb[0].mxu0
        %v502 = vadd.f32 %v434, %v501
        %v503 = vpop.f32.mrb[0].mxu0
        %504 = vmatprep.mubr.bf16.mxu0 0
        %505 = vmatmul.mubr.bf16.gmra.mrb[0].mxu0 %v358
        %v506 = vpop.f32.mrb[0].mxu0
        %v507 = vadd.f32 %v434, %v506
        %v508 = vpop.f32.mrb[0].mxu0
        %v509 = vpop.f32.mrb[0].mxu0
        %v510 = vadd.f32 %v434, %v509
        %v511 = vpop.f32.mrb[0].mxu0
        %512 = vdwg.mxu0
        %v513 = vpack.c.bf16 %v398, %v395
        %v514 = vpack.c.bf16 %v406, %v403
        %v515 = vpack.c.bf16 %v414, %v411
        %v516 = vpack.c.bf16 %v422, %v419
        %v521 = vunpack.c.l.b16 %v513
        %v522 = vunpack.c.h.b16 %v513
        %v523 = vunpack.c.l.b16 %v514
        %v524 = vunpack.c.h.b16 %v514
        %v525 = vunpack.c.l.b16 %v515
        %v526 = vunpack.c.h.b16 %v515
        %v527 = vunpack.c.l.b16 %v516
        %v528 = vunpack.c.h.b16 %v516
        %v529 = vpack.c.b16 %v521, %v521
        %v530 = vpack.c.b16 %v522, %v522
        %v531 = vpack.c.b16 %v523, %v523
        %v532 = vpack.c.b16 %v524, %v524
        %v533 = vpack.c.b16 %v525, %v525
        %v534 = vpack.c.b16 %v526, %v526
        %v535 = vpack.c.b16 %v527, %v527
        %v536 = vpack.c.b16 %v528, %v528
        %545 = vst [vmem:[%s275] sm:$0xf] %v529
        %546 = vst [vmem:[%s275 + $0x4] sm:$0xf] %v530
        %547 = vst [vmem:[%s275 + $0x8] sm:$0xf] %v531
        %548 = vst [vmem:[%s275 + $0xc] sm:$0xf] %v532
        %549 = vst [vmem:[%s275 + $0x10] sm:$0xf] %v533
        %550 = vst [vmem:[%s275 + $0x14] sm:$0xf] %v534
        %551 = vst [vmem:[%s275 + $0x18] sm:$0xf] %v535
        %552 = vst [vmem:[%s275 + $0x1c] sm:$0xf] %v536
        %v553 = vpack.c.bf16 %v486, %v483
        %v554 = vpack.c.bf16 %v494, %v491
        %v555 = vpack.c.bf16 %v502, %v499
        %v556 = vpack.c.bf16 %v510, %v507
        %v561 = vunpack.c.l.b16 %v553
        %v562 = vunpack.c.h.b16 %v553
        %v563 = vunpack.c.l.b16 %v554
        %v564 = vunpack.c.h.b16 %v554
        %v565 = vunpack.c.l.b16 %v555
        %v566 = vunpack.c.h.b16 %v555
        %v567 = vunpack.c.l.b16 %v556
        %v568 = vunpack.c.h.b16 %v556
        %v569 = vpack.c.b16 %v561, %v561
        %v570 = vpack.c.b16 %v562, %v562
        %v571 = vpack.c.b16 %v563, %v563
        %v572 = vpack.c.b16 %v564, %v564
        %v573 = vpack.c.b16 %v565, %v565
        %v574 = vpack.c.b16 %v566, %v566
        %v575 = vpack.c.b16 %v567, %v567
        %v576 = vpack.c.b16 %v568, %v568
        %585 = vst [vmem:[%s282] sm:$0xf] %v569
        %586 = vst [vmem:[%s282 + $0x4] sm:$0xf] %v570
        %587 = vst [vmem:[%s282 + $0x8] sm:$0xf] %v571
        %588 = vst [vmem:[%s282 + $0xc] sm:$0xf] %v572
        %589 = vst [vmem:[%s282 + $0x10] sm:$0xf] %v573
        %590 = vst [vmem:[%s282 + $0x14] sm:$0xf] %v574
        %591 = vst [vmem:[%s282 + $0x18] sm:$0xf] %v575
        %592 = vst [vmem:[%s282 + $0x1c] sm:$0xf] %v576
        %s593 = sand.u32 %s158, 1
        %s594 = scalar_lea.sflag [#allocation3], %s593
        %s595 = sand.u32 %s158, 1
        %s596 = smul.addr %s595, 32
        %s597 = scalar_lea.vmem [#allocation2], %s596
        %s598 = sand.u32 %s186, 1
        %s599 = scalar_lea.sflag [#allocation5], %s598
        %s600 = sand.u32 %s186, 1
        %s601 = smul.addr %s600, 32
        %s602 = scalar_lea.vmem [#allocation4], %s601
        // Predicated region
        $region41: #{tpu_custom_call.1} parent=39 // pred_check
          %p603 = pneg %p168
        $region42: #{tpu_custom_call.1} parent=39 // pred_check_branch
          %605 = sbr.rel (%p603) target = $region44
        $region43: #{tpu_custom_call.1} parent=39 // pred_region
          %s606 = smul.u32 8, %s29
          %s608 = ssub.s32 512, 512
          %609 = vsyncadd %s594, %s608
          %s610 = smul.addr %s28, 8
          %s611 = sadd.s32 %s606, %s610
          %s612 = smul.addr %s611, 64
          %s613 = scalar_lea.hbm %s5, %s612
          %s614 = sshll.u32 %s597, 4
          %s615 = int_to_ptr.vmem [resolvable:$true] %s614
          %620 = dma.vmem_to_hbm [thread:$0]  %s615, 512, %s613, %s594, 64, 64, 4
        $region44: #{tpu_custom_call.1} parent=39 // pred_fallthru
          _
        // Predicated region
        $region45: #{tpu_custom_call.1} parent=39 // pred_check
          %p621 = pneg %p196
        $region46: #{tpu_custom_call.1} parent=39 // pred_check_branch
          %623 = sbr.rel (%p621) target = $region48
        $region47: #{tpu_custom_call.1} parent=39 // pred_region
          %s624 = smul.u32 8, %s29
          %s626 = ssub.s32 512, 512
          %627 = vsyncadd %s599, %s626
          %s628 = smul.addr %s28, 8
          %s629 = sadd.s32 %s624, %s628
          %s630 = smul.addr %s629, 64
          %s631 = scalar_lea.hbm %s6, %s630
          %s632 = sshll.u32 %s602, 4
          %s633 = int_to_ptr.vmem [resolvable:$true] %s632
          %638 = dma.vmem_to_hbm [thread:$0]  %s633, 512, %s631, %s599, 64, 64, 4
        $region48: #{tpu_custom_call.1} parent=39 // pred_fallthru
          _
      $region40: #{tpu_custom_call.1} parent=5 // pred_fallthru
        _
      %p639 = scmp.le.s32.totalorder 2, %s19
      // Predicated region
      $region49: #{tpu_custom_call.1} parent=5 // pred_check
        %p640 = pneg %p639
      $region50: #{tpu_custom_call.1} parent=5 // pred_check_branch
        %642 = sbr.rel (%p640) target = $region52
      $region51: #{tpu_custom_call.1} parent=5 // pred_region
        %s643 = ssub.s32 %s19, 2
        // Predicated region
        $region53: #{tpu_custom_call.1} parent=51 // pred_check
          %p644 = pneg %p174
        $region54: #{tpu_custom_call.1} parent=51 // pred_check_branch
          %646 = sbr.rel (%p644) target = $region56
        $region55: #{tpu_custom_call.1} parent=51 // pred_region
          %s647 = sand.u32 %s159, 1
          %s648 = scalar_lea.sflag [#allocation3], %s647
          %s649 = sand.u32 %s159, 1
          %s650 = smul.addr %s649, 32
          %s651 = scalar_lea.vmem [#allocation2], %s650
          %652 = dma.done %s648, 512
        $region56: #{tpu_custom_call.1} parent=51 // pred_fallthru
          _
        // Predicated region
        $region57: #{tpu_custom_call.1} parent=51 // pred_check
          %p653 = pneg %p202
        $region58: #{tpu_custom_call.1} parent=51 // pred_check_branch
          %655 = sbr.rel (%p653) target = $region60
        $region59: #{tpu_custom_call.1} parent=51 // pred_region
          %s656 = sand.u32 %s187, 1
          %s657 = scalar_lea.sflag [#allocation5], %s656
          %s658 = sand.u32 %s187, 1
          %s659 = smul.addr %s658, 32
          %s660 = scalar_lea.vmem [#allocation4], %s659
          %661 = dma.done %s657, 512
        $region60: #{tpu_custom_call.1} parent=51 // pred_fallthru
          _
      $region52: #{tpu_custom_call.1} parent=5 // pred_fallthru
        _
    $region6: #{tpu_custom_call.1} parent=1 // loop_footer
      %s23 = sadd.s32 1, %s19
    $region7: #{tpu_custom_call.1} parent=1 // loop_footer_branch
      %18 = sbr.rel target = $region3
    $region8: #{tpu_custom_call.1} parent=1 // loop_exit
      _
    %662 = vsyncpa [#allocation3], 1
    %s663 = scalar_lea.sflag [#allocation3], 1
    %664 = vsyncpa %s663, 1
    %665 = vsyncpa [#allocation5], 1
    %s666 = scalar_lea.sflag [#allocation5], 1
    %667 = vsyncpa %s666, 1

</llo_original>
